<compile_context>
chip_gen: v7x
topology: tpu7x:2x2x1
jax: 0.10.0
libtpu: 0.0.40
codegen_flags: <defaults>
</compile_context>

<pallas_src>
import functools

import jax
import jax.numpy as jnp
from jax import lax
from jax.experimental import pallas as pl
from jax.experimental.pallas import tpu as pltpu


# Contract the last (feature) dim of both operands: (M,K) x (N,K) -> (M,N).
_WXT_DIMS = (((1,), (1,)), ((), ()))


def _round_up(x: int, m: int) -> int:
    return ((x + m - 1) // m) * m


def _pick_tile(requested, dim, align):
    """Largest legal tile <= requested; a full-dim block is always legal."""
    if requested is None or requested >= dim:
        return dim
    t = (requested // align) * align
    if t < align:
        t = align
    return dim if t >= dim else t


def _vmem_budget_bytes():
    try:
        cap = int(pltpu.get_tpu_info().vmem_capacity_bytes)
    except Exception:
        cap = 64 << 20  # conservative fallback (v7x per-TC VMEM)
    return cap, int(0.75 * cap)


# --------------------------------------------------------------------------
# Kernels
# --------------------------------------------------------------------------
def _resident_kernel(w_ref, x_ref, o_ref, *, compute_dtype, apply_threshold):
    """Single-pass step: o[i,j] = f(W_panel[i] @ X_panel[j]^T).

    The K axis is not tiled; the W panel stays VMEM-resident across the j
    sweep (its block index is constant in j so Pallas skips the re-DMA).
    """
    w = w_ref[...].astype(compute_dtype)
    x = x_ref[...].astype(compute_dtype)
    acc = lax.dot_general(w, x, _WXT_DIMS, preferred_element_type=jnp.float32)
    if apply_threshold:
        o_ref[...] = (acc >= 0.0).astype(o_ref.dtype)
    else:
        o_ref[...] = acc.astype(o_ref.dtype)


def _ktiled_kernel(w_ref, x_ref, o_ref, *scratch, compute_dtype,
                   apply_threshold, acc_in_out, tk, d_total):
    """K-tiled reduction step; accumulates into o_ref (f32) or a scratch."""
    k = pl.program_id(2)
    acc_ref = o_ref if acc_in_out else scratch[0]

    @pl.when(k == 0)
    def _init():
        acc_ref[...] = jnp.zeros_like(acc_ref)

    w = w_ref[...]
    x = x_ref[...]
    if d_total % tk != 0:
        # The padded region of the last K tile holds arbitrary bits (possibly
        # NaN); zero BOTH operands there so no garbage reaches the MXU.
        w_col = k * tk + lax.broadcasted_iota(jnp.int32, w.shape, 1)
        x_col = k * tk + lax.broadcasted_iota(jnp.int32, x.shape, 1)
        w = jnp.where(w_col < d_total, w, jnp.zeros_like(w))
        x = jnp.where(x_col < d_total, x, jnp.zeros_like(x))

    acc_ref[...] += lax.dot_general(
        w.astype(compute_dtype), x.astype(compute_dtype), _WXT_DIMS,
        preferred_element_type=jnp.float32)

    if not acc_in_out:
        @pl.when(k == pl.num_programs(2) - 1)
        def _finalize():
            if apply_threshold:
                o_ref[...] = (acc_ref[...] >= 0.0).astype(o_ref.dtype)
            else:
                o_ref[...] = acc_ref[...].astype(o_ref.dtype)


# --------------------------------------------------------------------------
# Wrapper
# --------------------------------------------------------------------------
def _w_xT(weights, X, *, out_dtype, apply_threshold, compute_dtype,
          tm=None, tn=None, tk=None):
    M, D = weights.shape
    N, D2 = X.shape
    assert D == D2, "feature dims must match"

    vmem_cap, vmem_budget = _vmem_budget_bytes()
    two_core_likely = vmem_cap <= (64 << 20)  # v7x: 2 TCs, 64 MiB VMEM/TC

    # Generation-tuned defaults: MXU-bound arithmetic intensity while
    # double-buffering comfortably inside the per-core VMEM budget.
    if vmem_cap >= (100 << 20):                # v5e / v6e (128 MiB VMEM)
        tm_d, tn_d, tk_d = 1024, 2048, 1024
    else:                                      # v7x (64 MiB VMEM per TC)
        tm_d, tn_d, tk_d = 512, 1024, 1024

    tm = _pick_tile(tm if tm is not None else tm_d, M, 32)   # sublane, int8-safe
    tn = _pick_tile(tn if tn is not None else tn_d, N, 128)  # output lane dim

    # Megacore: ensure a parallel axis has >= 2 tiles on 2-TC chips.
    if two_core_likely and pl.cdiv(M, tm) * pl.cdiv(N, tn) == 1 and N >= 256:
        tn = _pick_tile(_round_up(pl.cdiv(N, 2), 128), N, 128)

    w_bytes = jnp.dtype(weights.dtype).itemsize
    x_bytes = jnp.dtype(X.dtype).itemsize
    o_bytes = jnp.dtype(out_dtype).itemsize
    c_bytes = jnp.dtype(compute_dtype).itemsize

    # ---- K handling: resident (tk == D, no reduction axis) vs K-tiled.
    if tk is None:
        resident_bytes = (2 * (tm * D * w_bytes + tn * D * x_bytes)
                          + 2 * tm * tn * o_bytes)
        tk = D if resident_bytes * 5 // 4 <= vmem_budget else _pick_tile(tk_d, D, 128)
    else:
        tk = _pick_tile(tk, D, 128)
    use_k_grid = tk < D

    n_i, n_j = pl.cdiv(M, tm), pl.cdiv(N, tn)

    # ---- conditional narrow-precision pre-cast: only pays off when an
    # operand is re-streamed from HBM >= 3 times; otherwise cast in-kernel.
    if use_k_grid:
        w_reuse, x_reuse = n_j, n_i
    else:
        w_reuse, x_reuse = 1, n_i          # W panel is VMEM-resident across j
    if c_bytes < w_bytes and w_reuse >= 3:
        weights = weights.astype(compute_dtype)
        w_bytes = c_bytes
    if c_bytes < x_bytes and x_reuse >= 3:
        X = X.astype(compute_dtype)
        x_bytes = c_bytes

    if not use_k_grid:
        # ---------------- resident-K path (no reduction grid axis) --------
        base_vmem = 2 * tm * D * w_bytes + 2 * tm * tn * o_bytes
        x_buffers = 2
        if n_j >= 4 and base_vmem + 3 * tn * D * x_bytes <= vmem_budget * 4 // 5:
            x_buffers = 3                   # deepen pipeline on streamed X
        if x_buffers == 3:
            x_spec = pl.BlockSpec((tn, D), lambda i, j: (j, 0),
                                  pipeline_mode=pl.Buffered(3))
        else:
            x_spec = pl.BlockSpec((tn, D), lambda i, j: (j, 0))

        tile_vmem = base_vmem + x_buffers * tn * D * x_bytes
        vmem_limit = min(vmem_budget, max(tile_vmem * 5 // 4, 32 << 20))
        cost = pl.CostEstimate(
            flops=2 * M * N * D, transcendentals=0,
            bytes_accessed=int(M * D * w_bytes + n_i * N * D * x_bytes
                               + M * N * o_bytes))
        kernel = functools.partial(_resident_kernel,
                                   compute_dtype=compute_dtype,
                                   apply_threshold=apply_threshold)
        return pl.pallas_call(
            kernel,
            out_shape=jax.ShapeDtypeStruct((M, N), out_dtype),
            grid_spec=pltpu.PrefetchScalarGridSpec(
                num_scalar_prefetch=0,
                grid=(n_i, n_j),
                in_specs=[pl.BlockSpec((tm, D), lambda i, j: (i, 0)), x_spec],
                out_specs=pl.BlockSpec((tm, tn), lambda i, j: (i, j)),
            ),
            compiler_params=pltpu.CompilerParams(
                dimension_semantics=("parallel", "parallel"),
                vmem_limit_bytes=int(vmem_limit)),
            cost_estimate=cost,
        )(weights, X)

    # -------------------- K-tiled reduction path --------------------------
    n_k = pl.cdiv(D, tk)
    acc_in_out = (not apply_threshold) and jnp.dtype(out_dtype) == jnp.dtype(jnp.float32)
    scratch_shapes = [] if acc_in_out else [pltpu.VMEM((tm, tn), jnp.float32)]

    tile_vmem = (2 * (tm * tk * w_bytes + tn * tk * x_bytes)
                 + 2 * tm * tn * o_bytes
                 + (0 if acc_in_out else tm * tn * 4))
    vmem_limit = min(vmem_budget, max(tile_vmem * 5 // 4, 32 << 20))
    cost = pl.CostEstimate(
        flops=2 * M * N * D, transcendentals=0,
        bytes_accessed=int(n_j * M * D * w_bytes + n_i * N * D * x_bytes
                           + M * N * o_bytes))
    kernel = functools.partial(
        _ktiled_kernel, compute_dtype=compute_dtype,
        apply_threshold=apply_threshold, acc_in_out=acc_in_out,
        tk=tk, d_total=D)
    return pl.pallas_call(
        kernel,
        out_shape=jax.ShapeDtypeStruct((M, N), out_dtype),
        grid_spec=pltpu.PrefetchScalarGridSpec(
            num_scalar_prefetch=0,
            grid=(n_i, n_j, n_k),
            in_specs=[pl.BlockSpec((tm, tk), lambda i, j, k: (i, k)),
                      pl.BlockSpec((tn, tk), lambda i, j, k: (j, k))],
            out_specs=pl.BlockSpec((tm, tn), lambda i, j, k: (i, j)),
            scratch_shapes=scratch_shapes,
        ),
        compiler_params=pltpu.CompilerParams(
            dimension_semantics=("parallel", "parallel", "arbitrary"),
            vmem_limit_bytes=int(vmem_limit)),
        cost_estimate=cost,
    )(weights, X)


def linear_forward(weights, X, *, compute_dtype=jnp.bfloat16,
                   out_dtype=jnp.float32, tm=None, tn=None, tk=None):
    """Pallas equivalent of LinearModel.forward: weights @ X.T -> (M, N)."""
    return _w_xT(weights, X, out_dtype=out_dtype, apply_threshold=False,
                 compute_dtype=compute_dtype, tm=tm, tn=tn, tk=tk)


def predict(weights, X, *, compute_dtype=jnp.float32, tm=None, tn=None, tk=None):
    """LinearModel.predict: (weights @ X.T) >= 0, thresholded in-kernel.

    Defaults to f32 compute so the sign at ~0 matches torch numerics.
    """
    mask_i8 = _w_xT(weights, X, out_dtype=jnp.int8, apply_threshold=True,
                    compute_dtype=compute_dtype, tm=tm, tn=tn, tk=tk)
    return mask_i8.astype(jnp.bool_)


if __name__ == "__main__":
    key = jax.random.PRNGKey(0)
    kw, kx, kw2, kx2, kw3, kx3 = jax.random.split(key, 6)

    # --- Test 1: tiny LinearModel-like shapes (resident, full-block path) --
    M, D, N = 8, 32, 16
    weights = jax.random.normal(kw, (M, D), dtype=jnp.float32)
    X = jax.random.normal(kx, (N, D), dtype=jnp.float32)
    ref = jnp.matmul(weights, X.T, precision=lax.Precision.HIGHEST)

    out_f32 = jax.block_until_ready(
        linear_forward(weights, X, compute_dtype=jnp.float32))
    assert out_f32.shape == (M, N)
    assert jnp.allclose(out_f32, ref, atol=1e-4, rtol=1e-4), "f32 fwd mismatch"

    out_bf = jax.block_until_ready(linear_forward(weights, X))  # bf16 compute
    ref_bf = jnp.matmul(weights.astype(jnp.bfloat16).astype(jnp.float32),
                        X.astype(jnp.bfloat16).astype(jnp.float32).T,
                        precision=lax.Precision.HIGHEST)
    assert out_bf.shape == (M, N)
    assert jnp.allclose(out_bf, ref_bf, atol=1e-2, rtol=1e-2), "bf16 fwd mismatch"

    pred = jax.block_until_ready(predict(weights, X))           # f32 compute
    assert pred.shape == (M, N) and pred.dtype == jnp.bool_
    ok = (pred == (ref >= 0.0)) | (jnp.abs(ref) < 1e-3)
    assert bool(jnp.all(ok)), "predict mismatch"

    # --- Test 2: K-tiled path, masked K edge, partial M/N blocks ----------
    M2, D2, N2 = 72, 400, 200
    w2 = jax.random.normal(kw2, (M2, D2), dtype=jnp.float32)
    x2 = jax.random.normal(kx2, (N2, D2), dtype=jnp.float32)
    ref2 = jnp.matmul(w2, x2.T, precision=lax.Precision.HIGHEST)

    out2 = jax.block_until_ready(
        linear_forward(w2, x2, compute_dtype=jnp.float32,
                       tm=32, tn=128, tk=128))
    assert out2.shape == (M2, N2)
    assert jnp.allclose(out2, ref2, atol=1e-3, rtol=1e-3), "k-tiled fwd mismatch"

    pred2 = jax.block_until_ready(predict(w2, x2, tm=32, tn=128, tk=128))
    ok2 = (pred2 == (ref2 >= 0.0)) | (jnp.abs(ref2) < 5e-3)
    assert bool(jnp.all(ok2)), "k-tiled predict mismatch"

    # --- Test 3: resident path with long streamed-X sweep (Buffered(3)) ---
    M3, D3, N3 = 16, 256, 1024
    w3 = jax.random.normal(kw3, (M3, D3), dtype=jnp.float32)
    x3 = jax.random.normal(kx3, (N3, D3), dtype=jnp.float32)
    ref3 = jnp.matmul(w3, x3.T, precision=lax.Precision.HIGHEST)
    out3 = jax.block_until_ready(
        linear_forward(w3, x3, compute_dtype=jnp.float32, tn=128))
    assert jnp.allclose(out3, ref3, atol=1e-3, rtol=1e-3), "streamed fwd mismatch"

    print("KERNEL_OK")
</pallas_src>

<mosaic_0001>
module attributes {stable_mosaic.version = 11 : i64} {
  func.func @_resident_kernel(%arg0: i32, %arg1: i32, %arg2: memref<8x32xf32, #tpu.memory_space<vmem>>, %arg3: memref<16x32xf32, #tpu.memory_space<vmem>>, %arg4: memref<8x16xf32, #tpu.memory_space<vmem>>) attributes {dimension_semantics = [#tpu.dimension_semantics<parallel>, #tpu.dimension_semantics<parallel>], iteration_bounds = array<i64: 1, 1>, scalar_prefetch = 0 : i64, scratch_operands = 0 : i64, tpu.core_type = #tpu.core_type<tc>, window_params = [{transform_indices = @transform_0, window_bounds = array<i64: 8, 32>}, {transform_indices = @transform_1, window_bounds = array<i64: 16, 32>}, {transform_indices = @transform_2, window_bounds = array<i64: 8, 16>}]} {
    %c0 = arith.constant 0 : index
    %c0_0 = arith.constant 0 : index
    %0 = vector.load %arg2[%c0, %c0_0] : memref<8x32xf32, #tpu.memory_space<vmem>>, vector<8x32xf32>
    %c0_1 = arith.constant 0 : index
    %c0_2 = arith.constant 0 : index
    %1 = vector.load %arg3[%c0_1, %c0_2] : memref<16x32xf32, #tpu.memory_space<vmem>>, vector<16x32xf32>
    %cst = arith.constant dense<0.000000e+00> : vector<8x16xf32>
    %2 = tpu.matmul %0, %1, %cst {dimension_numbers = #tpu.dot_dimension_numbers<[1], [1], [0], [0], [0, 0, 1, 0], [], []>} : vector<8x32xf32>, vector<16x32xf32>, vector<8x16xf32> -> vector<8x16xf32>
    %c0_3 = arith.constant 0 : index
    %c0_4 = arith.constant 0 : index
    %3 = vector.load %arg4[%c0_3, %c0_4] : memref<8x16xf32, #tpu.memory_space<vmem>>, vector<8x16xf32>
    tpu.vector_store %arg4[%c0_3, %c0_4], %2 {strides = array<i32>} : memref<8x16xf32, #tpu.memory_space<vmem>>, vector<8x16xf32>,
    return
  }
  func.func @transform_0(%arg0: i32, %arg1: i32) -> (i32, i32) {
    %c0_i32 = arith.constant 0 : i32
    %c0_i32_0 = arith.constant 0 : i32
    return %arg0, %c0_i32 : i32, i32
  }
  func.func @transform_1(%arg0: i32, %arg1: i32) -> (i32, i32) {
    %c0_i32 = arith.constant 0 : i32
    %c0_i32_0 = arith.constant 0 : i32
    return %arg1, %c0_i32 : i32, i32
  }
  func.func @transform_2(%arg0: i32, %arg1: i32) -> (i32, i32) {
    %c0_i32 = arith.constant 0 : i32
    return %arg0, %arg1 : i32, i32
  }
}

</mosaic_0001>

<llo_original>
// kernel: tpu_custom_call.1
$region0: #{tpu_custom_call.1}
  #allocation0 [shape = 'u32[]', space=smem, size = 0x4, offset = 0x4, fixed_abs, tag = 'smem constant byte address 0x4 - core index']
  #allocation1 [shape = 'u32[144,128]{1,0:T(1,128)}', space=vmem, size = 0x12000, scoped, tag = 'internal scratch']
  %s0 = inlined_call_operand.hbm [shape: f32[8,32], index: 0, kind: input, shape index: {}]
  %s1 = inlined_call_operand.hbm [shape: f32[16,32], index: 1, kind: input, shape index: {}]
  %s2 = inlined_call_operand.hbm [shape: f32[8,16], index: 2, kind: output, shape index: {}]
  %s3 = sld [smem:[#allocation0]]
  $region26: #{tpu_custom_call.1} parent=0
    _
  %s5 = ssub.s32 1, %s3
  %s6 = scalar_select 0, %s5, %s3
  $region1: #{tpu_custom_call.1} parent=0
    #allocation2 [shape = 'u8[4096]{0}', space=vmem, size = 0x1000, scoped, tag = 'input window, operand 0, single buffered']
    #allocation3 [shape = 's32[1]{0}', space=sflag, size = 0x4, scoped, tag = 'scoped memory for tpu_custom_call.1']
    #allocation4 [shape = 's32[1]{0}', space=sflag, size = 0x4, scoped, tag = 'scoped memory for tpu_custom_call.1']
    #allocation5 [shape = 'u8[8192]{0}', space=vmem, size = 0x2000, scoped, tag = 'input window, operand 1, single buffered']
    #allocation6 [shape = 's32[1]{0}', space=sflag, size = 0x4, scoped, tag = 'scoped memory for tpu_custom_call.1']
    #allocation7 [shape = 'u8[4096]{0}', space=vmem, size = 0x1000, scoped, tag = 'output window, operand 0, single buffered']
    %7 = vsyncpa [#allocation3], 0
    %8 = vsyncpa [#allocation6], 0
    %9 = vsyncpa [#allocation4], 0
    // Predicated region
    $region2: #{tpu_custom_call.1} parent=1 // pred_check
      _
    $region3: #{tpu_custom_call.1} parent=1 // pred_check_branch
      %11 = sbr.rel (0) target = $region5
    $region4: #{tpu_custom_call.1} parent=1 // pred_region
      %s13 = ssub.s32 128, 128
      %14 = vsyncadd [#allocation3], %s13
      %s16 = sshll.u32 [#allocation2], 4
      %s17 = int_to_ptr.vmem [resolvable:$true] %s16
      %19 = dma.hbm_to_vmem [thread:$0]  %s0, 128, %s17, [#allocation3]
    $region5: #{tpu_custom_call.1} parent=1 // pred_fallthru
      _
    // Predicated region
    $region6: #{tpu_custom_call.1} parent=1 // pred_check
      _
    $region7: #{tpu_custom_call.1} parent=1 // pred_check_branch
      %21 = sbr.rel (0) target = $region9
    $region8: #{tpu_custom_call.1} parent=1 // pred_region
      %s23 = ssub.s32 256, 256
      %24 = vsyncadd [#allocation6], %s23
      %s25 = sshll.u32 [#allocation5], 4
      %s26 = int_to_ptr.vmem [resolvable:$true] %s25
      %31 = dma.hbm_to_vmem [thread:$0]  %s1, 256, %s26, [#allocation6], 128, 128, 8
    $region9: #{tpu_custom_call.1} parent=1 // pred_fallthru
      _
    // Predicated region
    $region10: #{tpu_custom_call.1} parent=1 // pred_check
      _
    $region11: #{tpu_custom_call.1} parent=1 // pred_check_branch
      %33 = sbr.rel (0) target = $region13
    $region12: #{tpu_custom_call.1} parent=1 // pred_region
      %34 = dma.done [#allocation3], 128
    $region13: #{tpu_custom_call.1} parent=1 // pred_fallthru
      _
    // Predicated region
    $region14: #{tpu_custom_call.1} parent=1 // pred_check
      _
    $region15: #{tpu_custom_call.1} parent=1 // pred_check_branch
      %36 = sbr.rel (0) target = $region17
    $region16: #{tpu_custom_call.1} parent=1 // pred_region
      %37 = dma.done [#allocation6], 256
    $region17: #{tpu_custom_call.1} parent=1 // pred_fallthru
      _
    %v38 = vld [vmem:[#allocation2] sm:$0xff]
    %v39 = vld [vmem:[#allocation5] sm:$0xff]
    %v40 = vld [vmem:[#allocation5 + $0x8] sm:$0xff]
    %vm41 = vcmask 261120
    %v43 = vsel %vm41, %v38, 0
    %v46 = vsel %vm41, %v39, 0
    %v49 = vsel %vm41, %v40, 0
    %51 = vmatprep.subr.mxu0 0.0
    %52 = vmatpush1.xpose.msra.mxu0 %v46
    %53 = vmatprep.subr.mxu0 0.0
    %54 = vmatpush1.xpose.msra.mxu0 %v49
    %55 = vmatprep.subr.mxu0 0.0
    %56 = vmatpush1.xpose.msra.mxu0 0.0
    %57 = vmatprep.subr.mxu0 0.0
    %58 = vmatpush1.xpose.msra.mxu0 0.0
    %59 = vmatprep.subr.mxu0 0.0
    %60 = vmatpush1.xpose.msra.mxu0 0.0
    %61 = vmatprep.subr.mxu0 0.0
    %62 = vmatpush1.xpose.msra.mxu0 0.0
    %63 = vmatprep.subr.mxu0 0.0
    %64 = vmatpush1.xpose.msra.mxu0 0.0
    %65 = vmatprep.subr.mxu0 0.0
    %66 = vmatpush1.xpose.msra.mxu0 0.0
    %67 = vmatprep.subr.mxu0 0.0
    %68 = vmatpush1.xpose.msra.mxu0 0.0
    %69 = vmatprep.subr.mxu0 0.0
    %70 = vmatpush1.xpose.msra.mxu0 0.0
    %71 = vmatprep.subr.mxu0 0.0
    %72 = vmatpush1.xpose.msra.mxu0 0.0
    %73 = vmatprep.subr.mxu0 0.0
    %74 = vmatpush1.xpose.msra.mxu0 0.0
    %75 = vmatprep.subr.mxu0 0.0
    %76 = vmatpush1.xpose.msra.mxu0 0.0
    %77 = vmatprep.subr.mxu0 0.0
    %78 = vmatpush1.xpose.msra.mxu0 0.0
    %79 = vmatprep.subr.mxu0 0.0
    %80 = vmatpush1.xpose.msra.mxu0 0.0
    %81 = vmatprep.subr.mxu0 0.0
    %82 = vmatpush1.xpose.msra.mxu0 0.0
    %83 = vmatprep.subr.mxu0 0.0
    %84 = vmatpush1.xpose.msra.mxu0 0.0
    %85 = vmatprep.subr.mxu0 0.0
    %86 = vmatpush1.xpose.msra.mxu0 0.0
    %87 = vmatprep.subr.mxu0 0.0
    %88 = vmatpush1.xpose.msra.mxu0 0.0
    %89 = vmatprep.subr.mxu0 0.0
    %90 = vmatpush1.xpose.msra.mxu0 0.0
    %91 = vmatprep.subr.mxu0 0.0
    %92 = vmatpush1.xpose.msra.mxu0 0.0
    %93 = vmatprep.subr.mxu0 0.0
    %94 = vmatpush1.xpose.msra.mxu0 0.0
    %95 = vmatprep.subr.mxu0 0.0
    %96 = vmatpush1.xpose.msra.mxu0 0.0
    %97 = vmatprep.subr.mxu0 0.0
    %98 = vmatpush1.xpose.msra.mxu0 0.0
    %99 = vmatprep.subr.mxu0 0.0
    %100 = vmatpush1.xpose.msra.mxu0 0.0
    %101 = vmatprep.subr.mxu0 0.0
    %102 = vmatpush1.xpose.msra.mxu0 0.0
    %103 = vmatprep.subr.mxu0 0.0
    %104 = vmatpush1.xpose.msra.mxu0 0.0
    %105 = vmatprep.subr.mxu0 0.0
    %106 = vmatpush1.xpose.msra.mxu0 0.0
    %107 = vmatprep.subr.mxu0 0.0
    %108 = vmatpush1.xpose.msra.mxu0 0.0
    %109 = vmatprep.subr.mxu0 0.0
    %110 = vmatpush1.xpose.msra.mxu0 0.0
    %111 = vmatprep.subr.mxu0 0.0
    %112 = vmatpush1.xpose.msra.mxu0 0.0
    %113 = vmatprep.subr.mxu0 0.0
    %114 = vmatpush1.xpose.msra.mxu0 0.0
    %115 = vmatprep.mubr.f32.mxu0 0.0
    %116 = vmatmul.mubr.f32.gmra.mrb[0].mxu0 %v43
    %v117 = vpop.f32.mrb[0].mxu0
    %v118 = vadd.f32 0.0, %v117
    %v119 = vpop.f32.mrb[0].mxu0
    %120 = vdwg.mxu0
    %vm121 = vcmask 130048
    %122 = vst.msk [vmem:[#allocation7] sm:$0xff] %vm121, %v118
    // Predicated region
    $region18: #{tpu_custom_call.1} parent=1 // pred_check
      _
    $region19: #{tpu_custom_call.1} parent=1 // pred_check_branch
      %124 = sbr.rel (0) target = $region21
    $region20: #{tpu_custom_call.1} parent=1 // pred_region
      %s126 = ssub.s32 128, 128
      %127 = vsyncadd [#allocation4], %s126
      %s129 = sshll.u32 [#allocation7], 4
      %s130 = int_to_ptr.vmem [resolvable:$true] %s129
      %132 = dma.vmem_to_hbm [thread:$0]  %s130, 128, %s2, [#allocation4]
    $region21: #{tpu_custom_call.1} parent=1 // pred_fallthru
      _
    // Predicated region
    $region22: #{tpu_custom_call.1} parent=1 // pred_check
      _
    $region23: #{tpu_custom_call.1} parent=1 // pred_check_branch
      %134 = sbr.rel (0) target = $region25
    $region24: #{tpu_custom_call.1} parent=1 // pred_region
      %135 = dma.done [#allocation4], 128
    $region25: #{tpu_custom_call.1} parent=1 // pred_fallthru
      _
    %136 = vsyncpa [#allocation3], 1
    %137 = vsyncpa [#allocation6], 1
    %138 = vsyncpa [#allocation4], 1

</llo_original>
